<compile_context>
chip_gen: v7x
topology: tpu7x:2x2x1
jax: 0.10.0
libtpu: 0.0.40
codegen_flags: <defaults>
</compile_context>

<pallas_src>
import functools

import jax
import jax.numpy as jnp
from jax.experimental import pallas as pl
from jax.experimental.pallas import tpu as pltpu

BN_EPS = 1e-5
LANE = 128
TB_MAX = 1024          # max batch-tile rows (per perf review: 1024-2048)


def _pad_up(n, m):
    return ((n + m - 1) // m) * m


# ----------------------------------------------------------------------------
# Fused Pallas kernel: 10 x (MXU matmul + bias [+ ReLU]) with an L2-normalize
# inserted after layer `l2_after`.  Everything stays in VMEM / vregs.
# ----------------------------------------------------------------------------
def _fused_imu_kernel(x_ref, w0_ref, ws_ref, b_ref, o_ref, *,
                      relu_flags, l2_after, n_out):
    n_layers = len(relu_flags)
    h = x_ref[...].astype(jnp.bfloat16)            # (tb, fin_real) bf16
    for li in range(n_layers):
        w = w0_ref[...] if li == 0 else ws_ref[li - 1]   # bf16 (fin_p, 128)
        # bf16 MXU matmul, f32 accumulation; bias/ReLU epilogue in f32.
        y = jnp.dot(h, w, preferred_element_type=jnp.float32)
        y = y + b_ref[pl.ds(li, 1), :]             # (1, 128) f32 bias row
        if relu_flags[li]:
            y = jnp.maximum(y, 0.0)
        if li == l2_after:
            # z / ||z||_2 in f32: padded lanes are exactly zero -> exact sum.
            ss = jnp.sum(y * y, axis=-1, keepdims=True)
            y = y * jax.lax.rsqrt(ss)              # matches torch z / z.norm()
        if li == n_layers - 1:
            # True-width (masked) store: only n_out lanes reach HBM.
            o_ref[...] = y[:, :n_out]
        else:
            h = y.astype(jnp.bfloat16)             # bf16 carry between layers


def fused_imu_forward(fused, x):
    """x: (B, ...) IMU tensor; returns (B, out_features) float32."""
    w0, ws, b_all = fused["w0"], fused["ws"], fused["b_all"]
    relu_flags, l2_after = fused["relu"], fused["l2_after"]
    n_out = fused["out_features"]

    B = x.shape[0]
    x2 = x.reshape(B, -1).astype(jnp.float32)      # x.view(B, -1), NO padding
    fin0 = x2.shape[1]
    assert fin0 == w0.shape[0], (fin0, w0.shape)

    # Batch tiling: single tile for tiny B; >=2 tiles as soon as B > 128 so
    # both TensorCores get work (v7x); capped at TB_MAX rows per tile.
    if B <= 128:
        tb = B
    elif B <= 2 * TB_MAX:
        tb = min(_pad_up(pl.cdiv(B, 2), 8), TB_MAX)
    else:
        tb = TB_MAX
    grid = (pl.cdiv(B, tb),)                       # ragged last tile is masked

    n_layers = len(relu_flags)
    flops = 2 * B * (w0.shape[0] * w0.shape[1]
                     + (n_layers - 1) * ws.shape[1] * ws.shape[2])
    bytes_accessed = (x2.size * 4 + B * n_out * 4
                      + w0.size * 2 + ws.size * 2 + b_all.size * 4)

    kernel = functools.partial(_fused_imu_kernel, relu_flags=relu_flags,
                               l2_after=l2_after, n_out=n_out)
    out = pl.pallas_call(
        kernel,
        grid=grid,
        in_specs=[
            pl.BlockSpec((tb, fin0), lambda i: (i, 0)),          # x tile
            pl.BlockSpec(w0.shape, lambda i: (0, 0)),            # first weight
            pl.BlockSpec(ws.shape, lambda i: (0, 0, 0)),         # stacked W
            pl.BlockSpec(b_all.shape, lambda i: (0, 0)),         # stacked b
        ],
        out_specs=pl.BlockSpec((tb, n_out), lambda i: (i, 0)),
        out_shape=jax.ShapeDtypeStruct((B, n_out), jnp.float32),
        compiler_params=pltpu.CompilerParams(
            dimension_semantics=("parallel",),
            vmem_limit_bytes=32 * 1024 * 1024),
        cost_estimate=pl.CostEstimate(flops=flops,
                                      transcendentals=B,
                                      bytes_accessed=bytes_accessed),
    )(x2, w0, ws, b_all)
    return out


# ----------------------------------------------------------------------------
# Deterministic parameter construction (PyTorch-like shapes & init ranges)
# ----------------------------------------------------------------------------
def init_linear(key, fan_in, fan_out):
    k1, k2 = jax.random.split(key)
    bound = 1.0 / (fan_in ** 0.5)
    w = jax.random.uniform(k1, (fan_out, fan_in), jnp.float32, -bound, bound)
    b = jax.random.uniform(k2, (fan_out,), jnp.float32, -bound, bound)
    return {"w": w, "b": b}


def init_bn(key, n):
    k1, k2, k3, k4 = jax.random.split(key, 4)
    return {
        "gamma": 1.0 + 0.1 * jax.random.normal(k1, (n,), jnp.float32),
        "beta": 0.1 * jax.random.normal(k2, (n,), jnp.float32),
        "mean": 0.1 * jax.random.normal(k3, (n,), jnp.float32),
        "var": 1.0 + 0.1 * jax.random.uniform(k4, (n,), jnp.float32),
    }


def init_mlp(key, in_size, hid, out):
    k1, k2, k3, k4 = jax.random.split(key, 4)
    return {
        "lin1": init_linear(k1, in_size, hid), "bn1": init_bn(k2, hid),
        "lin2": init_linear(k3, hid, out), "bn2": init_bn(k4, out),
    }


def init_imu_mlp(key, input_size, hidden_size, output_size):
    k1, k2, k3 = jax.random.split(key, 3)
    h4, h16 = hidden_size // 4, hidden_size // 16
    return {
        "mlp1": init_mlp(k1, input_size, hidden_size, h4),
        "mlp2": init_mlp(k2, h4, h4, h16),
        "fin": init_linear(k3, h16, output_size),
    }


def init_cm_fusion(key, input_size, hidden_size, output_size):
    k1, k2 = jax.random.split(key)
    return {
        # TODO(synk): FE_rgb (ResNet18-based RGB_Action) parameters not built.
        "fe_imu": init_imu_mlp(k1, input_size, hidden_size * 2, hidden_size),
        "joint": init_imu_mlp(k2, hidden_size, hidden_size // 2, output_size),
        "logit_scale": jnp.array(jnp.log(1.0 / 0.07), jnp.float32),  # unused
    }


# ----------------------------------------------------------------------------
# One-time parameter prep: BN fold, transpose, pad, bf16 cast, STACK
# ----------------------------------------------------------------------------
def _fold_bn(lin, bn):
    """Fold eval-mode BatchNorm into Linear; returns (w(Fout,Fin), b(Fout)) f32."""
    w = lin["w"].astype(jnp.float32)               # (Fout, Fin) PyTorch layout
    b = lin["b"].astype(jnp.float32)
    if bn is not None:
        s = bn["gamma"] * jax.lax.rsqrt(bn["var"] + BN_EPS)
        w = w * s[:, None]
        b = (b - bn["mean"]) * s + bn["beta"]
    return w, b


def prepare_fused_params(params):
    layers = []                                    # [(w, b, relu), ...]
    for branch in ("fe_imu", "joint"):
        p = params[branch]
        for mkey in ("mlp1", "mlp2"):
            m = p[mkey]
            for lkey, bkey in (("lin1", "bn1"), ("lin2", "bn2")):
                w, b = _fold_bn(m[lkey], m[bkey])
                layers.append((w, b, True))
        # Dropout(0.5) between mlp1/mlp2 is identity in eval mode.
        w, b = _fold_bn(p["fin"], None)            # plain Linear: no BN / ReLU
        layers.append((w, b, False))

    # Common padded feature width P (all hidden/output dims; layer-0 fan-in
    # stays at its real value so the input never needs lane padding).
    dims = []
    for i, (w, _, _) in enumerate(layers):
        dims.append(w.shape[0])                    # fan-out
        if i > 0:
            dims.append(w.shape[1])                # fan-in (layers > 0)
    P = _pad_up(max(dims), LANE)

    fin0 = layers[0][0].shape[1]
    n_layers = len(layers)

    # First-layer weight: (fin_real, P) bf16 — keeps the input un-padded.
    w0f, b0f, _ = layers[0]
    w0 = jnp.zeros((fin0, P), jnp.float32).at[:, :w0f.shape[0]].set(w0f.T)

    # Remaining weights stacked into one (n_layers-1, P, P) bf16 slab.
    ws = jnp.zeros((n_layers - 1, P, P), jnp.float32)
    for li in range(1, n_layers):
        w, _, _ = layers[li]
        fout, fin = w.shape
        ws = ws.at[li - 1, :fin, :fout].set(w.T)

    # All biases stacked into one (n_layers, P) f32 slab.
    b_all = jnp.zeros((n_layers, P), jnp.float32)
    for li, (_, b, _) in enumerate(layers):
        b_all = b_all.at[li, :b.shape[0]].set(b)

    return {
        "w0": w0.astype(jnp.bfloat16),
        "ws": ws.astype(jnp.bfloat16),
        "b_all": b_all,
        "relu": tuple(r for _, _, r in layers),
        "l2_after": 4,                             # normalize z = FE_imu(x)
        "out_features": int(layers[-1][0].shape[0]),
    }


# ----------------------------------------------------------------------------
# Forward (eval mode)
# ----------------------------------------------------------------------------
def cm_fusion_forward(fused, x, sensors):
    if "RGB" in sensors:
        # TODO(synk): RGB branch requires the pretrained ResNet18 backbone of
        # RGB_Action; not implemented. IMU-only path is supported.
        raise NotImplementedError("RGB branch not translated to Pallas")
    if "IMU" not in sensors:
        raise ValueError("unknown sensors")
    return fused_imu_forward(fused, x)


# ----------------------------------------------------------------------------
if __name__ == "__main__":
    key = jax.random.PRNGKey(0)
    kp, kx = jax.random.split(key)

    # IMU sample: 6 channels x 8 timesteps -> flattened input_size = 48
    batch = 8
    input_size = 6 * 8
    hidden_size = 64
    output_size = 10

    params = init_cm_fusion(kp, input_size, hidden_size, output_size)
    fused = prepare_fused_params(params)          # one-time prep (BN fold etc.)
    x_imu = jax.random.normal(kx, (batch, 6, 8), jnp.float32)

    out = cm_fusion_forward(fused, x_imu, sensors=["IMU"])
    out = jax.block_until_ready(out)

    assert out.shape == (batch, output_size), out.shape
    assert out.dtype == jnp.float32
    assert bool(jnp.all(jnp.isfinite(out)))
    print("KERNEL_OK")
</pallas_src>

<mosaic_0001>
module attributes {stable_mosaic.version = 11 : i64} {
  func.func @_fused_imu_kernel(%arg0: i32, %arg1: memref<8x48xf32, #tpu.memory_space<vmem>>, %arg2: memref<48x128xbf16, #tpu.memory_space<vmem>>, %arg3: memref<9x128x128xbf16, #tpu.memory_space<vmem>>, %arg4: memref<10x128xf32, #tpu.memory_space<vmem>>, %arg5: memref<8x10xf32, #tpu.memory_space<vmem>>) attributes {dimension_semantics = [#tpu.dimension_semantics<parallel>], iteration_bounds = array<i64: 1>, scalar_prefetch = 0 : i64, scratch_operands = 0 : i64, tpu.core_type = #tpu.core_type<tc>, window_params = [{transform_indices = @transform_0, window_bounds = array<i64: 8, 48>}, {pipeline_mode = #tpu.pipeline_mode<synchronous>, transform_indices = @transform_1, window_bounds = array<i64: 48, 128>}, {pipeline_mode = #tpu.pipeline_mode<synchronous>, transform_indices = @transform_2, window_bounds = array<i64: 9, 128, 128>}, {pipeline_mode = #tpu.pipeline_mode<synchronous>, transform_indices = @transform_3, window_bounds = array<i64: 10, 128>}, {transform_indices = @transform_4, window_bounds = array<i64: 8, 10>}]} {
    %c0 = arith.constant 0 : index
    %c0_0 = arith.constant 0 : index
    %0 = vector.load %arg1[%c0, %c0_0] : memref<8x48xf32, #tpu.memory_space<vmem>>, vector<8x48xf32>
    %1 = arith.truncf %0 : vector<8x48xf32> to vector<8x48xbf16>
    %c0_1 = arith.constant 0 : index
    %c0_2 = arith.constant 0 : index
    %2 = vector.load %arg2[%c0_1, %c0_2] : memref<48x128xbf16, #tpu.memory_space<vmem>>, vector<48x128xbf16>
    %cst = arith.constant dense<0.000000e+00> : vector<8x128xf32>
    %3 = tpu.matmul %1, %2, %cst {dimension_numbers = #tpu.dot_dimension_numbers<[1], [0], [0], [1], [0, 0, 1, 1], [], []>} : vector<8x48xbf16>, vector<48x128xbf16>, vector<8x128xf32> -> vector<8x128xf32>
    %c0_3 = arith.constant 0 : index
    %c0_4 = arith.constant 0 : index
    %4 = vector.load %arg4[%c0_3, %c0_4] : memref<10x128xf32, #tpu.memory_space<vmem>>, vector<1x128xf32>
    %5 = vector.broadcast %4 : vector<1x128xf32> to vector<8x128xf32>
    %6 = arith.addf %3, %5 : vector<8x128xf32>
    %cst_5 = arith.constant 0.000000e+00 : f32
    %7 = vector.broadcast %cst_5 : f32 to vector<8x128xf32>
    %8 = arith.maximumf %6, %7 : vector<8x128xf32>
    %9 = arith.truncf %8 : vector<8x128xf32> to vector<8x128xbf16>
    %c0_6 = arith.constant 0 : index
    %c0_7 = arith.constant 0 : index
    %c0_8 = arith.constant 0 : index
    %10 = vector.load %arg3[%c0_6, %c0_7, %c0_8] : memref<9x128x128xbf16, #tpu.memory_space<vmem>>, vector<1x128x128xbf16>
    %11 = vector.shape_cast %10 : vector<1x128x128xbf16> to vector<128x128xbf16>
    %cst_9 = arith.constant dense<0.000000e+00> : vector<8x128xf32>
    %12 = tpu.matmul %9, %11, %cst_9 {dimension_numbers = #tpu.dot_dimension_numbers<[1], [0], [0], [1], [0, 0, 1, 1], [], []>} : vector<8x128xbf16>, vector<128x128xbf16>, vector<8x128xf32> -> vector<8x128xf32>
    %c1 = arith.constant 1 : index
    %c0_10 = arith.constant 0 : index
    %13 = vector.load %arg4[%c1, %c0_10] : memref<10x128xf32, #tpu.memory_space<vmem>>, vector<1x128xf32>
    %14 = vector.broadcast %13 : vector<1x128xf32> to vector<8x128xf32>
    %15 = arith.addf %12, %14 : vector<8x128xf32>
    %cst_11 = arith.constant 0.000000e+00 : f32
    %16 = vector.broadcast %cst_11 : f32 to vector<8x128xf32>
    %17 = arith.maximumf %15, %16 : vector<8x128xf32>
    %18 = arith.truncf %17 : vector<8x128xf32> to vector<8x128xbf16>
    %c1_12 = arith.constant 1 : index
    %c0_13 = arith.constant 0 : index
    %c0_14 = arith.constant 0 : index
    %19 = vector.load %arg3[%c1_12, %c0_13, %c0_14] : memref<9x128x128xbf16, #tpu.memory_space<vmem>>, vector<1x128x128xbf16>
    %20 = vector.shape_cast %19 : vector<1x128x128xbf16> to vector<128x128xbf16>
    %cst_15 = arith.constant dense<0.000000e+00> : vector<8x128xf32>
    %21 = tpu.matmul %18, %20, %cst_15 {dimension_numbers = #tpu.dot_dimension_numbers<[1], [0], [0], [1], [0, 0, 1, 1], [], []>} : vector<8x128xbf16>, vector<128x128xbf16>, vector<8x128xf32> -> vector<8x128xf32>
    %c2 = arith.constant 2 : index
    %c0_16 = arith.constant 0 : index
    %22 = vector.load %arg4[%c2, %c0_16] : memref<10x128xf32, #tpu.memory_space<vmem>>, vector<1x128xf32>
    %23 = vector.broadcast %22 : vector<1x128xf32> to vector<8x128xf32>
    %24 = arith.addf %21, %23 : vector<8x128xf32>
    %cst_17 = arith.constant 0.000000e+00 : f32
    %25 = vector.broadcast %cst_17 : f32 to vector<8x128xf32>
    %26 = arith.maximumf %24, %25 : vector<8x128xf32>
    %27 = arith.truncf %26 : vector<8x128xf32> to vector<8x128xbf16>
    %c2_18 = arith.constant 2 : index
    %c0_19 = arith.constant 0 : index
    %c0_20 = arith.constant 0 : index
    %28 = vector.load %arg3[%c2_18, %c0_19, %c0_20] : memref<9x128x128xbf16, #tpu.memory_space<vmem>>, vector<1x128x128xbf16>
    %29 = vector.shape_cast %28 : vector<1x128x128xbf16> to vector<128x128xbf16>
    %cst_21 = arith.constant dense<0.000000e+00> : vector<8x128xf32>
    %30 = tpu.matmul %27, %29, %cst_21 {dimension_numbers = #tpu.dot_dimension_numbers<[1], [0], [0], [1], [0, 0, 1, 1], [], []>} : vector<8x128xbf16>, vector<128x128xbf16>, vector<8x128xf32> -> vector<8x128xf32>
    %c3 = arith.constant 3 : index
    %c0_22 = arith.constant 0 : index
    %31 = vector.load %arg4[%c3, %c0_22] : memref<10x128xf32, #tpu.memory_space<vmem>>, vector<1x128xf32>
    %32 = vector.broadcast %31 : vector<1x128xf32> to vector<8x128xf32>
    %33 = arith.addf %30, %32 : vector<8x128xf32>
    %cst_23 = arith.constant 0.000000e+00 : f32
    %34 = vector.broadcast %cst_23 : f32 to vector<8x128xf32>
    %35 = arith.maximumf %33, %34 : vector<8x128xf32>
    %36 = arith.truncf %35 : vector<8x128xf32> to vector<8x128xbf16>
    %c3_24 = arith.constant 3 : index
    %c0_25 = arith.constant 0 : index
    %c0_26 = arith.constant 0 : index
    %37 = vector.load %arg3[%c3_24, %c0_25, %c0_26] : memref<9x128x128xbf16, #tpu.memory_space<vmem>>, vector<1x128x128xbf16>
    %38 = vector.shape_cast %37 : vector<1x128x128xbf16> to vector<128x128xbf16>
    %cst_27 = arith.constant dense<0.000000e+00> : vector<8x128xf32>
    %39 = tpu.matmul %36, %38, %cst_27 {dimension_numbers = #tpu.dot_dimension_numbers<[1], [0], [0], [1], [0, 0, 1, 1], [], []>} : vector<8x128xbf16>, vector<128x128xbf16>, vector<8x128xf32> -> vector<8x128xf32>
    %c4 = arith.constant 4 : index
    %c0_28 = arith.constant 0 : index
    %40 = vector.load %arg4[%c4, %c0_28] : memref<10x128xf32, #tpu.memory_space<vmem>>, vector<1x128xf32>
    %41 = vector.broadcast %40 : vector<1x128xf32> to vector<8x128xf32>
    %42 = arith.addf %39, %41 : vector<8x128xf32>
    %43 = arith.mulf %42, %42 : vector<8x128xf32>
    %cst_29 = arith.constant dense<0.000000e+00> : vector<8xf32>
    %44 = vector.multi_reduction <add>, %43, %cst_29 [1] : vector<8x128xf32> to vector<8xf32>
    %45 = vector.shape_cast %44 : vector<8xf32> to vector<8x1xf32>
    %46 = math.rsqrt %45 : vector<8x1xf32>
    %47 = vector.broadcast %46 : vector<8x1xf32> to vector<8x128xf32>
    %48 = arith.mulf %42, %47 : vector<8x128xf32>
    %49 = arith.truncf %48 : vector<8x128xf32> to vector<8x128xbf16>
    %c4_30 = arith.constant 4 : index
    %c0_31 = arith.constant 0 : index
    %c0_32 = arith.constant 0 : index
    %50 = vector.load %arg3[%c4_30, %c0_31, %c0_32] : memref<9x128x128xbf16, #tpu.memory_space<vmem>>, vector<1x128x128xbf16>
    %51 = vector.shape_cast %50 : vector<1x128x128xbf16> to vector<128x128xbf16>
    %cst_33 = arith.constant dense<0.000000e+00> : vector<8x128xf32>
    %52 = tpu.matmul %49, %51, %cst_33 {dimension_numbers = #tpu.dot_dimension_numbers<[1], [0], [0], [1], [0, 0, 1, 1], [], []>} : vector<8x128xbf16>, vector<128x128xbf16>, vector<8x128xf32> -> vector<8x128xf32>
    %c5 = arith.constant 5 : index
    %c0_34 = arith.constant 0 : index
    %53 = vector.load %arg4[%c5, %c0_34] : memref<10x128xf32, #tpu.memory_space<vmem>>, vector<1x128xf32>
    %54 = vector.broadcast %53 : vector<1x128xf32> to vector<8x128xf32>
    %55 = arith.addf %52, %54 : vector<8x128xf32>
    %cst_35 = arith.constant 0.000000e+00 : f32
    %56 = vector.broadcast %cst_35 : f32 to vector<8x128xf32>
    %57 = arith.maximumf %55, %56 : vector<8x128xf32>
    %58 = arith.truncf %57 : vector<8x128xf32> to vector<8x128xbf16>
    %c5_36 = arith.constant 5 : index
    %c0_37 = arith.constant 0 : index
    %c0_38 = arith.constant 0 : index
    %59 = vector.load %arg3[%c5_36, %c0_37, %c0_38] : memref<9x128x128xbf16, #tpu.memory_space<vmem>>, vector<1x128x128xbf16>
    %60 = vector.shape_cast %59 : vector<1x128x128xbf16> to vector<128x128xbf16>
    %cst_39 = arith.constant dense<0.000000e+00> : vector<8x128xf32>
    %61 = tpu.matmul %58, %60, %cst_39 {dimension_numbers = #tpu.dot_dimension_numbers<[1], [0], [0], [1], [0, 0, 1, 1], [], []>} : vector<8x128xbf16>, vector<128x128xbf16>, vector<8x128xf32> -> vector<8x128xf32>
    %c6 = arith.constant 6 : index
    %c0_40 = arith.constant 0 : index
    %62 = vector.load %arg4[%c6, %c0_40] : memref<10x128xf32, #tpu.memory_space<vmem>>, vector<1x128xf32>
    %63 = vector.broadcast %62 : vector<1x128xf32> to vector<8x128xf32>
    %64 = arith.addf %61, %63 : vector<8x128xf32>
    %cst_41 = arith.constant 0.000000e+00 : f32
    %65 = vector.broadcast %cst_41 : f32 to vector<8x128xf32>
    %66 = arith.maximumf %64, %65 : vector<8x128xf32>
    %67 = arith.truncf %66 : vector<8x128xf32> to vector<8x128xbf16>
    %c6_42 = arith.constant 6 : index
    %c0_43 = arith.constant 0 : index
    %c0_44 = arith.constant 0 : index
    %68 = vector.load %arg3[%c6_42, %c0_43, %c0_44] : memref<9x128x128xbf16, #tpu.memory_space<vmem>>, vector<1x128x128xbf16>
    %69 = vector.shape_cast %68 : vector<1x128x128xbf16> to vector<128x128xbf16>
    %cst_45 = arith.constant dense<0.000000e+00> : vector<8x128xf32>
    %70 = tpu.matmul %67, %69, %cst_45 {dimension_numbers = #tpu.dot_dimension_numbers<[1], [0], [0], [1], [0, 0, 1, 1], [], []>} : vector<8x128xbf16>, vector<128x128xbf16>, vector<8x128xf32> -> vector<8x128xf32>
    %c7 = arith.constant 7 : index
    %c0_46 = arith.constant 0 : index
    %71 = vector.load %arg4[%c7, %c0_46] : memref<10x128xf32, #tpu.memory_space<vmem>>, vector<1x128xf32>
    %72 = vector.broadcast %71 : vector<1x128xf32> to vector<8x128xf32>
    %73 = arith.addf %70, %72 : vector<8x128xf32>
    %cst_47 = arith.constant 0.000000e+00 : f32
    %74 = vector.broadcast %cst_47 : f32 to vector<8x128xf32>
    %75 = arith.maximumf %73, %74 : vector<8x128xf32>
    %76 = arith.truncf %75 : vector<8x128xf32> to vector<8x128xbf16>
    %c7_48 = arith.constant 7 : index
    %c0_49 = arith.constant 0 : index
    %c0_50 = arith.constant 0 : index
    %77 = vector.load %arg3[%c7_48, %c0_49, %c0_50] : memref<9x128x128xbf16, #tpu.memory_space<vmem>>, vector<1x128x128xbf16>
    %78 = vector.shape_cast %77 : vector<1x128x128xbf16> to vector<128x128xbf16>
    %cst_51 = arith.constant dense<0.000000e+00> : vector<8x128xf32>
    %79 = tpu.matmul %76, %78, %cst_51 {dimension_numbers = #tpu.dot_dimension_numbers<[1], [0], [0], [1], [0, 0, 1, 1], [], []>} : vector<8x128xbf16>, vector<128x128xbf16>, vector<8x128xf32> -> vector<8x128xf32>
    %c8 = arith.constant 8 : index
    %c0_52 = arith.constant 0 : index
    %80 = vector.load %arg4[%c8, %c0_52] : memref<10x128xf32, #tpu.memory_space<vmem>>, vector<1x128xf32>
    %81 = vector.broadcast %80 : vector<1x128xf32> to vector<8x128xf32>
    %82 = arith.addf %79, %81 : vector<8x128xf32>
    %cst_53 = arith.constant 0.000000e+00 : f32
    %83 = vector.broadcast %cst_53 : f32 to vector<8x128xf32>
    %84 = arith.maximumf %82, %83 : vector<8x128xf32>
    %85 = arith.truncf %84 : vector<8x128xf32> to vector<8x128xbf16>
    %c8_54 = arith.constant 8 : index
    %c0_55 = arith.constant 0 : index
    %c0_56 = arith.constant 0 : index
    %86 = vector.load %arg3[%c8_54, %c0_55, %c0_56] : memref<9x128x128xbf16, #tpu.memory_space<vmem>>, vector<1x128x128xbf16>
    %87 = vector.shape_cast %86 : vector<1x128x128xbf16> to vector<128x128xbf16>
    %cst_57 = arith.constant dense<0.000000e+00> : vector<8x128xf32>
    %88 = tpu.matmul %85, %87, %cst_57 {dimension_numbers = #tpu.dot_dimension_numbers<[1], [0], [0], [1], [0, 0, 1, 1], [], []>} : vector<8x128xbf16>, vector<128x128xbf16>, vector<8x128xf32> -> vector<8x128xf32>
    %c9 = arith.constant 9 : index
    %c0_58 = arith.constant 0 : index
    %89 = vector.load %arg4[%c9, %c0_58] : memref<10x128xf32, #tpu.memory_space<vmem>>, vector<1x128xf32>
    %90 = vector.broadcast %89 : vector<1x128xf32> to vector<8x128xf32>
    %91 = arith.addf %88, %90 : vector<8x128xf32>
    %92 = vector.extract_strided_slice %91 {offsets = [0, 0], sizes = [8, 10], strides = [1, 1]} : vector<8x128xf32> to vector<8x10xf32>
    %c0_59 = arith.constant 0 : index
    %c0_60 = arith.constant 0 : index
    %93 = vector.load %arg5[%c0_59, %c0_60] : memref<8x10xf32, #tpu.memory_space<vmem>>, vector<8x10xf32>
    tpu.vector_store %arg5[%c0_59, %c0_60], %92 {strides = array<i32>} : memref<8x10xf32, #tpu.memory_space<vmem>>, vector<8x10xf32>,
    return
  }
  func.func @transform_0(%arg0: i32) -> (i32, i32) {
    %c0_i32 = arith.constant 0 : i32
    %c0_i32_0 = arith.constant 0 : i32
    return %arg0, %c0_i32 : i32, i32
  }
  func.func @transform_1(%arg0: i32) -> (i32, i32) {
    %c0_i32 = arith.constant 0 : i32
    %c0_i32_0 = arith.constant 0 : i32
    %c0_i32_1 = arith.constant 0 : i32
    return %c0_i32, %c0_i32_0 : i32, i32
  }
  func.func @transform_2(%arg0: i32) -> (i32, i32, i32) {
    %c0_i32 = arith.constant 0 : i32
    %c0_i32_0 = arith.constant 0 : i32
    %c0_i32_1 = arith.constant 0 : i32
    %c0_i32_2 = arith.constant 0 : i32
    return %c0_i32, %c0_i32_0, %c0_i32_1 : i32, i32, i32
  }
  func.func @transform_3(%arg0: i32) -> (i32, i32) {
    %c0_i32 = arith.constant 0 : i32
    %c0_i32_0 = arith.constant 0 : i32
    %c0_i32_1 = arith.constant 0 : i32
    return %c0_i32, %c0_i32_0 : i32, i32
  }
  func.func @transform_4(%arg0: i32) -> (i32, i32) {
    %c0_i32 = arith.constant 0 : i32
    %c0_i32_0 = arith.constant 0 : i32
    return %arg0, %c0_i32 : i32, i32
  }
}

</mosaic_0001>

<llo_original>
// kernel: tpu_custom_call.1
$region0: #{tpu_custom_call.1}
  #allocation0 [shape = 'u32[]', space=smem, size = 0x4, offset = 0x4, fixed_abs, tag = 'smem constant byte address 0x4 - core index']
  #allocation1 [shape = 'u32[144,128]{1,0:T(1,128)}', space=vmem, size = 0x12000, scoped, tag = 'internal scratch']
  %s0 = inlined_call_operand.hbm [shape: f32[8,48], index: 0, kind: input, shape index: {}]
  %s1 = inlined_call_operand.hbm [shape: bf16[48,128], index: 1, kind: input, shape index: {}]
  %s2 = inlined_call_operand.hbm [shape: bf16[9,128,128], index: 2, kind: input, shape index: {}]
  %s3 = inlined_call_operand.hbm [shape: f32[10,128], index: 3, kind: input, shape index: {}]
  %s4 = inlined_call_operand.hbm [shape: f32[8,10], index: 4, kind: output, shape index: {}]
  %s5 = sld [smem:[#allocation0]]
  $region42: #{tpu_custom_call.1} parent=0
    _
  %s7 = ssub.s32 1, %s5
  %s8 = scalar_select 0, %s7, %s5
  $region1: #{tpu_custom_call.1} parent=0
    #allocation2 [shape = 'u8[4096]{0}', space=vmem, size = 0x1000, scoped, tag = 'input window, operand 0, single buffered']
    #allocation3 [shape = 's32[1]{0}', space=sflag, size = 0x4, scoped, tag = 'scoped memory for tpu_custom_call.1']
    #allocation4 [shape = 's32[1]{0}', space=sflag, size = 0x4, scoped, tag = 'scoped memory for tpu_custom_call.1']
    #allocation5 [shape = 'u8[12288]{0}', space=vmem, size = 0x3000, scoped, tag = 'input window, operand 1, single buffered']
    #allocation6 [shape = 's32[1]{0}', space=sflag, size = 0x4, scoped, tag = 'scoped memory for tpu_custom_call.1']
    #allocation7 [shape = 'u8[294912]{0}', space=vmem, size = 0x48000, scoped, tag = 'input window, operand 2, single buffered']
    #allocation8 [shape = 'u8[8192]{0}', space=vmem, size = 0x2000, scoped, tag = 'input window, operand 3, single buffered']
    #allocation9 [shape = 's32[1]{0}', space=sflag, size = 0x4, scoped, tag = 'scoped memory for tpu_custom_call.1']
    #allocation10 [shape = 'u8[4096]{0}', space=vmem, size = 0x1000, scoped, tag = 'output window, operand 0, single buffered']
    %9 = vsyncpa [#allocation3], 0
    %10 = vsyncpa [#allocation6], 0
    %11 = vsyncpa [#allocation9], 0
    %12 = vsyncpa [#allocation4], 0
    // Predicated region
    $region2: #{tpu_custom_call.1} parent=1 // pred_check
      _
    $region3: #{tpu_custom_call.1} parent=1 // pred_check_branch
      %14 = sbr.rel (0) target = $region5
    $region4: #{tpu_custom_call.1} parent=1 // pred_region
      %s16 = ssub.s32 128, 128
      %17 = vsyncadd [#allocation3], %s16
      %s19 = sshll.u32 [#allocation2], 4
      %s20 = int_to_ptr.vmem [resolvable:$true] %s19
      %22 = dma.hbm_to_vmem [thread:$0]  %s0, 128, %s20, [#allocation3]
    $region5: #{tpu_custom_call.1} parent=1 // pred_fallthru
      _
    // Predicated region
    $region6: #{tpu_custom_call.1} parent=1 // pred_check
      _
    $region7: #{tpu_custom_call.1} parent=1 // pred_check_branch
      %24 = sbr.rel (0) target = $region9
    $region8: #{tpu_custom_call.1} parent=1 // pred_region
      %s26 = ssub.s32 384, 384
      %27 = vsyncadd [#allocation6], %s26
      %s28 = sshll.u32 [#allocation5], 4
      %s29 = int_to_ptr.vmem [resolvable:$true] %s28
      %34 = dma.hbm_to_vmem [thread:$0]  %s1, 384, %s29, [#allocation6], 64, 64, 4
    $region9: #{tpu_custom_call.1} parent=1 // pred_fallthru
      _
    // Predicated region
    $region10: #{tpu_custom_call.1} parent=1 // pred_check
      _
    $region11: #{tpu_custom_call.1} parent=1 // pred_check_branch
      %36 = sbr.rel (0) target = $region13
    $region12: #{tpu_custom_call.1} parent=1 // pred_region
      %s38 = ssub.s32 9216, 9216
      %39 = vsyncadd [#allocation6], %s38
      %s40 = sshll.u32 [#allocation7], 4
      %s41 = int_to_ptr.vmem [resolvable:$true] %s40
      %46 = dma.hbm_to_vmem [thread:$0]  %s2, 9216, %s41, [#allocation6], 64, 64, 4
    $region13: #{tpu_custom_call.1} parent=1 // pred_fallthru
      _
    // Predicated region
    $region14: #{tpu_custom_call.1} parent=1 // pred_check
      _
    $region15: #{tpu_custom_call.1} parent=1 // pred_check_branch
      %48 = sbr.rel (0) target = $region17
    $region16: #{tpu_custom_call.1} parent=1 // pred_region
      %s50 = ssub.s32 256, 256
      %51 = vsyncadd [#allocation9], %s50
      %s52 = sshll.u32 [#allocation8], 4
      %s53 = int_to_ptr.vmem [resolvable:$true] %s52
      %58 = dma.hbm_to_vmem [thread:$0]  %s3, 256, %s53, [#allocation9], 128, 128, 8
    $region17: #{tpu_custom_call.1} parent=1 // pred_fallthru
      _
    // Predicated region
    $region18: #{tpu_custom_call.1} parent=1 // pred_check
      _
    $region19: #{tpu_custom_call.1} parent=1 // pred_check_branch
      %60 = sbr.rel (0) target = $region21
    $region20: #{tpu_custom_call.1} parent=1 // pred_region
      %61 = dma.done [#allocation3], 128
    $region21: #{tpu_custom_call.1} parent=1 // pred_fallthru
      _
    // Predicated region
    $region22: #{tpu_custom_call.1} parent=1 // pred_check
      _
    $region23: #{tpu_custom_call.1} parent=1 // pred_check_branch
      %63 = sbr.rel (0) target = $region25
    $region24: #{tpu_custom_call.1} parent=1 // pred_region
      %64 = dma.done [#allocation6], 384
    $region25: #{tpu_custom_call.1} parent=1 // pred_fallthru
      _
    // Predicated region
    $region26: #{tpu_custom_call.1} parent=1 // pred_check
      _
    $region27: #{tpu_custom_call.1} parent=1 // pred_check_branch
      %66 = sbr.rel (0) target = $region29
    $region28: #{tpu_custom_call.1} parent=1 // pred_region
      %67 = dma.done [#allocation6], 9216
    $region29: #{tpu_custom_call.1} parent=1 // pred_fallthru
      _
    // Predicated region
    $region30: #{tpu_custom_call.1} parent=1 // pred_check
      _
    $region31: #{tpu_custom_call.1} parent=1 // pred_check_branch
      %69 = sbr.rel (0) target = $region33
    $region32: #{tpu_custom_call.1} parent=1 // pred_region
      %70 = dma.done [#allocation9], 256
    $region33: #{tpu_custom_call.1} parent=1 // pred_fallthru
      _
    %v72 = vld [vmem:[#allocation2] sm:$0xff]
    %v73 = vpack.c.bf16 %v72, %v72
    %v74 = vld [vmem:[#allocation5] sm:$0xf]
    %v75 = vld [vmem:[#allocation5 + $0x4] sm:$0xf]
    %v76 = vld [vmem:[#allocation5 + $0x8] sm:$0xf]
    %v77 = vld [vmem:[#allocation5 + $0xc] sm:$0xf]
    %v78 = vld [vmem:[#allocation5 + $0x10] sm:$0xf]
    %v79 = vld [vmem:[#allocation5 + $0x14] sm:$0xf]
    %v80 = vld [vmem:[#allocation8] sm:$0x1]
    %v81 = vlaneseq
    %v82 = vshrl.u32 %v81, 7
    %v83 = vsub.s32 0, %v82
    %v84 = vrot.slane %v80, %v83
    %v91 = vunpack.c.l.b16 %v74
    %v92 = vunpack.c.l.b16 %v75
    %v93 = vunpack.c.l.b16 %v76
    %v94 = vunpack.c.l.b16 %v77
    %v95 = vunpack.c.l.b16 %v78
    %v96 = vunpack.c.l.b16 %v79
    %v97 = vpack.c.b16 %v92, %v91
    %v98 = vpack.c.b16 %v94, %v93
    %v99 = vpack.c.b16 %v96, %v95
    %vm103 = vcmask 392192
    %v105 = vsel %vm103, %v73, 0
    %107 = vmatprep.subr.bf16.mxu0 0
    %108 = vmatpush1.bf16.msra.mxu0 %v97
    %109 = vmatprep.subr.bf16.mxu0 0
    %110 = vmatpush1.bf16.msra.mxu0 %v98
    %111 = vmatprep.subr.bf16.mxu0 0
    %112 = vmatpush1.bf16.msra.mxu0 %v99
    %113 = vmatprep.subr.bf16.mxu0 0
    %114 = vmatpush1.bf16.msra.mxu0 0
    %115 = vmatprep.subr.bf16.mxu0 0
    %116 = vmatpush1.bf16.msra.mxu0 0
    %117 = vmatprep.subr.bf16.mxu0 0
    %118 = vmatpush1.bf16.msra.mxu0 0
    %119 = vmatprep.subr.bf16.mxu0 0
    %120 = vmatpush1.bf16.msra.mxu0 0
    %121 = vmatprep.subr.bf16.mxu0 0
    %122 = vmatpush1.bf16.msra.mxu0 0
    %123 = vmatprep.subr.bf16.mxu0 0
    %124 = vmatpush1.bf16.msra.mxu0 0
    %125 = vmatprep.subr.bf16.mxu0 0
    %126 = vmatpush1.bf16.msra.mxu0 0
    %127 = vmatprep.subr.bf16.mxu0 0
    %128 = vmatpush1.bf16.msra.mxu0 0
    %129 = vmatprep.subr.bf16.mxu0 0
    %130 = vmatpush1.bf16.msra.mxu0 0
    %131 = vmatprep.subr.bf16.mxu0 0
    %132 = vmatpush1.bf16.msra.mxu0 0
    %133 = vmatprep.subr.bf16.mxu0 0
    %134 = vmatpush1.bf16.msra.mxu0 0
    %135 = vmatprep.subr.bf16.mxu0 0
    %136 = vmatpush1.bf16.msra.mxu0 0
    %137 = vmatprep.subr.bf16.mxu0 0
    %138 = vmatpush1.bf16.msra.mxu0 0
    %139 = vmatprep.mubr.bf16.mxu0 0
    %140 = vmatmul.mubr.bf16.gmra.mrb[0].mxu0 %v105
    %v141 = vpop.f32.mrb[0].mxu0
    %v142 = vadd.f32 %v84, %v141
    %v143 = vpop.f32.mrb[0].mxu0
    %v144 = vpop.f32.mrb[0].mxu0
    %v145 = vpop.f32.mrb[0].mxu0
    %146 = vdwg.mxu0
    %v147 = vmax.f32 %v142, 0.0
    %v148 = vpack.c.bf16 %v147, %v147
    %v149 = vld [vmem:[#allocation7] sm:$0xf]
    %v150 = vld [vmem:[#allocation7 + $0x4] sm:$0xf]
    %v151 = vld [vmem:[#allocation7 + $0x8] sm:$0xf]
    %v152 = vld [vmem:[#allocation7 + $0xc] sm:$0xf]
    %v153 = vld [vmem:[#allocation7 + $0x10] sm:$0xf]
    %v154 = vld [vmem:[#allocation7 + $0x14] sm:$0xf]
    %v155 = vld [vmem:[#allocation7 + $0x18] sm:$0xf]
    %v156 = vld [vmem:[#allocation7 + $0x1c] sm:$0xf]
    %v157 = vld [vmem:[#allocation7 + $0x20] sm:$0xf]
    %v158 = vld [vmem:[#allocation7 + $0x24] sm:$0xf]
    %v159 = vld [vmem:[#allocation7 + $0x28] sm:$0xf]
    %v160 = vld [vmem:[#allocation7 + $0x2c] sm:$0xf]
    %v161 = vld [vmem:[#allocation7 + $0x30] sm:$0xf]
    %v162 = vld [vmem:[#allocation7 + $0x34] sm:$0xf]
    %v163 = vld [vmem:[#allocation7 + $0x38] sm:$0xf]
    %v164 = vld [vmem:[#allocation7 + $0x3c] sm:$0xf]
    %v165 = vld [vmem:[#allocation8 + $0x1] sm:$0x1]
    %v166 = vlaneseq
    %v167 = vshrl.u32 %v166, 7
    %v168 = vsub.s32 0, %v167
    %v169 = vrot.slane %v165, %v168
    %v186 = vunpack.c.l.b16 %v149
    %v187 = vunpack.c.l.b16 %v150
    %v188 = vunpack.c.l.b16 %v151
    %v189 = vunpack.c.l.b16 %v152
    %v190 = vunpack.c.l.b16 %v153
    %v191 = vunpack.c.l.b16 %v154
    %v192 = vunpack.c.l.b16 %v155
    %v193 = vunpack.c.l.b16 %v156
    %v194 = vunpack.c.l.b16 %v157
    %v195 = vunpack.c.l.b16 %v158
    %v196 = vunpack.c.l.b16 %v159
    %v197 = vunpack.c.l.b16 %v160
    %v198 = vunpack.c.l.b16 %v161
    %v199 = vunpack.c.l.b16 %v162
    %v200 = vunpack.c.l.b16 %v163
    %v201 = vunpack.c.l.b16 %v164
    %v202 = vpack.c.b16 %v187, %v186
    %v203 = vpack.c.b16 %v189, %v188
    %v204 = vpack.c.b16 %v191, %v190
    %v205 = vpack.c.b16 %v193, %v192
    %v206 = vpack.c.b16 %v195, %v194
    %v207 = vpack.c.b16 %v197, %v196
    %v208 = vpack.c.b16 %v199, %v198
    %v209 = vpack.c.b16 %v201, %v200
    %218 = vmatprep.subr.bf16.mxu0 0
    %219 = vmatpush1.bf16.msra.mxu0 %v202
    %220 = vmatprep.subr.bf16.mxu0 0
    %221 = vmatpush1.bf16.msra.mxu0 %v203
    %222 = vmatprep.subr.bf16.mxu0 0
    %223 = vmatpush1.bf16.msra.mxu0 %v204
    %224 = vmatprep.subr.bf16.mxu0 0
    %225 = vmatpush1.bf16.msra.mxu0 %v205
    %226 = vmatprep.subr.bf16.mxu0 0
    %227 = vmatpush1.bf16.msra.mxu0 %v206
    %228 = vmatprep.subr.bf16.mxu0 0
    %229 = vmatpush1.bf16.msra.mxu0 %v207
    %230 = vmatprep.subr.bf16.mxu0 0
    %231 = vmatpush1.bf16.msra.mxu0 %v208
    %232 = vmatprep.subr.bf16.mxu0 0
    %233 = vmatpush1.bf16.msra.mxu0 %v209
    %234 = vmatprep.subr.bf16.mxu0 0
    %235 = vmatpush1.bf16.msra.mxu0 0
    %236 = vmatprep.subr.bf16.mxu0 0
    %237 = vmatpush1.bf16.msra.mxu0 0
    %238 = vmatprep.subr.bf16.mxu0 0
    %239 = vmatpush1.bf16.msra.mxu0 0
    %240 = vmatprep.subr.bf16.mxu0 0
    %241 = vmatpush1.bf16.msra.mxu0 0
    %242 = vmatprep.subr.bf16.mxu0 0
    %243 = vmatpush1.bf16.msra.mxu0 0
    %244 = vmatprep.subr.bf16.mxu0 0
    %245 = vmatpush1.bf16.msra.mxu0 0
    %246 = vmatprep.subr.bf16.mxu0 0
    %247 = vmatpush1.bf16.msra.mxu0 0
    %248 = vmatprep.subr.bf16.mxu0 0
    %249 = vmatpush1.bf16.msra.mxu0 0
    %250 = vmatprep.mubr.bf16.mxu0 0
    %251 = vmatmul.mubr.bf16.gmra.mrb[0].mxu0 %v148
    %v252 = vpop.f32.mrb[0].mxu0
    %v253 = vadd.f32 %v169, %v252
    %v254 = vpop.f32.mrb[0].mxu0
    %v255 = vpop.f32.mrb[0].mxu0
    %v256 = vpop.f32.mrb[0].mxu0
    %257 = vdwg.mxu0
    %v258 = vmax.f32 %v253, 0.0
    %v259 = vpack.c.bf16 %v258, %v258
    %s260 = scalar_lea.vmem [#allocation7], 64
    %v261 = vld [vmem:[%s260] sm:$0xf]
    %v262 = vld [vmem:[%s260 + $0x4] sm:$0xf]
    %v263 = vld [vmem:[%s260 + $0x8] sm:$0xf]
    %v264 = vld [vmem:[%s260 + $0xc] sm:$0xf]
    %v265 = vld [vmem:[%s260 + $0x10] sm:$0xf]
    %v266 = vld [vmem:[%s260 + $0x14] sm:$0xf]
    %v267 = vld [vmem:[%s260 + $0x18] sm:$0xf]
    %v268 = vld [vmem:[%s260 + $0x1c] sm:$0xf]
    %v269 = vld [vmem:[%s260 + $0x20] sm:$0xf]
    %v270 = vld [vmem:[%s260 + $0x24] sm:$0xf]
    %v271 = vld [vmem:[%s260 + $0x28] sm:$0xf]
    %v272 = vld [vmem:[%s260 + $0x2c] sm:$0xf]
    %v273 = vld [vmem:[%s260 + $0x30] sm:$0xf]
    %v274 = vld [vmem:[%s260 + $0x34] sm:$0xf]
    %v275 = vld [vmem:[%s260 + $0x38] sm:$0xf]
    %v276 = vld [vmem:[%s260 + $0x3c] sm:$0xf]
    %v277 = vld [vmem:[#allocation8 + $0x2] sm:$0x1]
    %v278 = vlaneseq
    %v279 = vshrl.u32 %v278, 7
    %v280 = vsub.s32 0, %v279
    %v281 = vrot.slane %v277, %v280
    %v298 = vunpack.c.l.b16 %v261
    %v299 = vunpack.c.l.b16 %v262
    %v300 = vunpack.c.l.b16 %v263
    %v301 = vunpack.c.l.b16 %v264
    %v302 = vunpack.c.l.b16 %v265
    %v303 = vunpack.c.l.b16 %v266
    %v304 = vunpack.c.l.b16 %v267
    %v305 = vunpack.c.l.b16 %v268
    %v306 = vunpack.c.l.b16 %v269
    %v307 = vunpack.c.l.b16 %v270
    %v308 = vunpack.c.l.b16 %v271
    %v309 = vunpack.c.l.b16 %v272
    %v310 = vunpack.c.l.b16 %v273
    %v311 = vunpack.c.l.b16 %v274
    %v312 = vunpack.c.l.b16 %v275
    %v313 = vunpack.c.l.b16 %v276
    %v314 = vpack.c.b16 %v299, %v298
    %v315 = vpack.c.b16 %v301, %v300
    %v316 = vpack.c.b16 %v303, %v302
    %v317 = vpack.c.b16 %v305, %v304
    %v318 = vpack.c.b16 %v307, %v306
    %v319 = vpack.c.b16 %v309, %v308
    %v320 = vpack.c.b16 %v311, %v310
    %v321 = vpack.c.b16 %v313, %v312
    %330 = vmatprep.subr.bf16.mxu0 0
    %331 = vmatpush1.bf16.msra.mxu0 %v314
    %332 = vmatprep.subr.bf16.mxu0 0
    %333 = vmatpush1.bf16.msra.mxu0 %v315
    %334 = vmatprep.subr.bf16.mxu0 0
    %335 = vmatpush1.bf16.msra.mxu0 %v316
    %336 = vmatprep.subr.bf16.mxu0 0
    %337 = vmatpush1.bf16.msra.mxu0 %v317
    %338 = vmatprep.subr.bf16.mxu0 0
    %339 = vmatpush1.bf16.msra.mxu0 %v318
    %340 = vmatprep.subr.bf16.mxu0 0
    %341 = vmatpush1.bf16.msra.mxu0 %v319
    %342 = vmatprep.subr.bf16.mxu0 0
    %343 = vmatpush1.bf16.msra.mxu0 %v320
    %344 = vmatprep.subr.bf16.mxu0 0
    %345 = vmatpush1.bf16.msra.mxu0 %v321
    %346 = vmatprep.subr.bf16.mxu0 0
    %347 = vmatpush1.bf16.msra.mxu0 0
    %348 = vmatprep.subr.bf16.mxu0 0
    %349 = vmatpush1.bf16.msra.mxu0 0
    %350 = vmatprep.subr.bf16.mxu0 0
    %351 = vmatpush1.bf16.msra.mxu0 0
    %352 = vmatprep.subr.bf16.mxu0 0
    %353 = vmatpush1.bf16.msra.mxu0 0
    %354 = vmatprep.subr.bf16.mxu0 0
    %355 = vmatpush1.bf16.msra.mxu0 0
    %356 = vmatprep.subr.bf16.mxu0 0
    %357 = vmatpush1.bf16.msra.mxu0 0
    %358 = vmatprep.subr.bf16.mxu0 0
    %359 = vmatpush1.bf16.msra.mxu0 0
    %360 = vmatprep.subr.bf16.mxu0 0
    %361 = vmatpush1.bf16.msra.mxu0 0
    %362 = vmatprep.mubr.bf16.mxu0 0
    %363 = vmatmul.mubr.bf16.gmra.mrb[0].mxu0 %v259
    %v364 = vpop.f32.mrb[0].mxu0
    %v365 = vadd.f32 %v281, %v364
    %v366 = vpop.f32.mrb[0].mxu0
    %v367 = vpop.f32.mrb[0].mxu0
    %v368 = vpop.f32.mrb[0].mxu0
    %369 = vdwg.mxu0
    %v370 = vmax.f32 %v365, 0.0
    %v371 = vpack.c.bf16 %v370, %v370
    %s372 = scalar_lea.vmem [#allocation7], 128
    %v373 = vld [vmem:[%s372] sm:$0xf]
    %v374 = vld [vmem:[%s372 + $0x4] sm:$0xf]
    %v375 = vld [vmem:[%s372 + $0x8] sm:$0xf]
    %v376 = vld [vmem:[%s372 + $0xc] sm:$0xf]
    %v377 = vld [vmem:[%s372 + $0x10] sm:$0xf]
    %v378 = vld [vmem:[%s372 + $0x14] sm:$0xf]
    %v379 = vld [vmem:[%s372 + $0x18] sm:$0xf]
    %v380 = vld [vmem:[%s372 + $0x1c] sm:$0xf]
    %v381 = vld [vmem:[%s372 + $0x20] sm:$0xf]
    %v382 = vld [vmem:[%s372 + $0x24] sm:$0xf]
    %v383 = vld [vmem:[%s372 + $0x28] sm:$0xf]
    %v384 = vld [vmem:[%s372 + $0x2c] sm:$0xf]
    %v385 = vld [vmem:[%s372 + $0x30] sm:$0xf]
    %v386 = vld [vmem:[%s372 + $0x34] sm:$0xf]
    %v387 = vld [vmem:[%s372 + $0x38] sm:$0xf]
    %v388 = vld [vmem:[%s372 + $0x3c] sm:$0xf]
    %v389 = vld [vmem:[#allocation8 + $0x3] sm:$0x1]
    %v390 = vlaneseq
    %v391 = vshrl.u32 %v390, 7
    %v392 = vsub.s32 0, %v391
    %v393 = vrot.slane %v389, %v392
    %v410 = vunpack.c.l.b16 %v373
    %v411 = vunpack.c.l.b16 %v374
    %v412 = vunpack.c.l.b16 %v375
    %v413 = vunpack.c.l.b16 %v376
    %v414 = vunpack.c.l.b16 %v377
    %v415 = vunpack.c.l.b16 %v378
    %v416 = vunpack.c.l.b16 %v379
    %v417 = vunpack.c.l.b16 %v380
    %v418 = vunpack.c.l.b16 %v381
    %v419 = vunpack.c.l.b16 %v382
    %v420 = vunpack.c.l.b16 %v383
    %v421 = vunpack.c.l.b16 %v384
    %v422 = vunpack.c.l.b16 %v385
    %v423 = vunpack.c.l.b16 %v386
    %v424 = vunpack.c.l.b16 %v387
    %v425 = vunpack.c.l.b16 %v388
    %v426 = vpack.c.b16 %v411, %v410
    %v427 = vpack.c.b16 %v413, %v412
    %v428 = vpack.c.b16 %v415, %v414
    %v429 = vpack.c.b16 %v417, %v416
    %v430 = vpack.c.b16 %v419, %v418
    %v431 = vpack.c.b16 %v421, %v420
    %v432 = vpack.c.b16 %v423, %v422
    %v433 = vpack.c.b16 %v425, %v424
    %442 = vmatprep.subr.bf16.mxu0 0
    %443 = vmatpush1.bf16.msra.mxu0 %v426
    %444 = vmatprep.subr.bf16.mxu0 0
    %445 = vmatpush1.bf16.msra.mxu0 %v427
    %446 = vmatprep.subr.bf16.mxu0 0
    %447 = vmatpush1.bf16.msra.mxu0 %v428
    %448 = vmatprep.subr.bf16.mxu0 0
    %449 = vmatpush1.bf16.msra.mxu0 %v429
    %450 = vmatprep.subr.bf16.mxu0 0
    %451 = vmatpush1.bf16.msra.mxu0 %v430
    %452 = vmatprep.subr.bf16.mxu0 0
    %453 = vmatpush1.bf16.msra.mxu0 %v431
    %454 = vmatprep.subr.bf16.mxu0 0
    %455 = vmatpush1.bf16.msra.mxu0 %v432
    %456 = vmatprep.subr.bf16.mxu0 0
    %457 = vmatpush1.bf16.msra.mxu0 %v433
    %458 = vmatprep.subr.bf16.mxu0 0
    %459 = vmatpush1.bf16.msra.mxu0 0
    %460 = vmatprep.subr.bf16.mxu0 0
    %461 = vmatpush1.bf16.msra.mxu0 0
    %462 = vmatprep.subr.bf16.mxu0 0
    %463 = vmatpush1.bf16.msra.mxu0 0
    %464 = vmatprep.subr.bf16.mxu0 0
    %465 = vmatpush1.bf16.msra.mxu0 0
    %466 = vmatprep.subr.bf16.mxu0 0
    %467 = vmatpush1.bf16.msra.mxu0 0
    %468 = vmatprep.subr.bf16.mxu0 0
    %469 = vmatpush1.bf16.msra.mxu0 0
    %470 = vmatprep.subr.bf16.mxu0 0
    %471 = vmatpush1.bf16.msra.mxu0 0
    %472 = vmatprep.subr.bf16.mxu0 0
    %473 = vmatpush1.bf16.msra.mxu0 0
    %474 = vmatprep.mubr.bf16.mxu0 0
    %475 = vmatmul.mubr.bf16.gmra.mrb[0].mxu0 %v371
    %v476 = vpop.f32.mrb[0].mxu0
    %v477 = vadd.f32 %v393, %v476
    %v478 = vpop.f32.mrb[0].mxu0
    %v479 = vpop.f32.mrb[0].mxu0
    %v480 = vpop.f32.mrb[0].mxu0
    %481 = vdwg.mxu0
    %v482 = vmax.f32 %v477, 0.0
    %v483 = vpack.c.bf16 %v482, %v482
    %s484 = scalar_lea.vmem [#allocation7], 192
    %v485 = vld [vmem:[%s484] sm:$0xf]
    %v486 = vld [vmem:[%s484 + $0x4] sm:$0xf]
    %v487 = vld [vmem:[%s484 + $0x8] sm:$0xf]
    %v488 = vld [vmem:[%s484 + $0xc] sm:$0xf]
    %v489 = vld [vmem:[%s484 + $0x10] sm:$0xf]
    %v490 = vld [vmem:[%s484 + $0x14] sm:$0xf]
    %v491 = vld [vmem:[%s484 + $0x18] sm:$0xf]
    %v492 = vld [vmem:[%s484 + $0x1c] sm:$0xf]
    %v493 = vld [vmem:[%s484 + $0x20] sm:$0xf]
    %v494 = vld [vmem:[%s484 + $0x24] sm:$0xf]
    %v495 = vld [vmem:[%s484 + $0x28] sm:$0xf]
    %v496 = vld [vmem:[%s484 + $0x2c] sm:$0xf]
    %v497 = vld [vmem:[%s484 + $0x30] sm:$0xf]
    %v498 = vld [vmem:[%s484 + $0x34] sm:$0xf]
    %v499 = vld [vmem:[%s484 + $0x38] sm:$0xf]
    %v500 = vld [vmem:[%s484 + $0x3c] sm:$0xf]
    %v501 = vld [vmem:[#allocation8 + $0x4] sm:$0x1]
    %v502 = vlaneseq
    %v503 = vshrl.u32 %v502, 7
    %v504 = vsub.s32 0, %v503
    %v505 = vrot.slane %v501, %v504
    %v522 = vunpack.c.l.b16 %v485
    %v523 = vunpack.c.l.b16 %v486
    %v524 = vunpack.c.l.b16 %v487
    %v525 = vunpack.c.l.b16 %v488
    %v526 = vunpack.c.l.b16 %v489
    %v527 = vunpack.c.l.b16 %v490
    %v528 = vunpack.c.l.b16 %v491
    %v529 = vunpack.c.l.b16 %v492
    %v530 = vunpack.c.l.b16 %v493
    %v531 = vunpack.c.l.b16 %v494
    %v532 = vunpack.c.l.b16 %v495
    %v533 = vunpack.c.l.b16 %v496
    %v534 = vunpack.c.l.b16 %v497
    %v535 = vunpack.c.l.b16 %v498
    %v536 = vunpack.c.l.b16 %v499
    %v537 = vunpack.c.l.b16 %v500
    %v538 = vpack.c.b16 %v523, %v522
    %v539 = vpack.c.b16 %v525, %v524
    %v540 = vpack.c.b16 %v527, %v526
    %v541 = vpack.c.b16 %v529, %v528
    %v542 = vpack.c.b16 %v531, %v530
    %v543 = vpack.c.b16 %v533, %v532
    %v544 = vpack.c.b16 %v535, %v534
    %v545 = vpack.c.b16 %v537, %v536
    %554 = vmatprep.subr.bf16.mxu0 0
    %555 = vmatpush1.bf16.msra.mxu0 %v538
    %556 = vmatprep.subr.bf16.mxu0 0
    %557 = vmatpush1.bf16.msra.mxu0 %v539
    %558 = vmatprep.subr.bf16.mxu0 0
    %559 = vmatpush1.bf16.msra.mxu0 %v540
    %560 = vmatprep.subr.bf16.mxu0 0
    %561 = vmatpush1.bf16.msra.mxu0 %v541
    %562 = vmatprep.subr.bf16.mxu0 0
    %563 = vmatpush1.bf16.msra.mxu0 %v542
    %564 = vmatprep.subr.bf16.mxu0 0
    %565 = vmatpush1.bf16.msra.mxu0 %v543
    %566 = vmatprep.subr.bf16.mxu0 0
    %567 = vmatpush1.bf16.msra.mxu0 %v544
    %568 = vmatprep.subr.bf16.mxu0 0
    %569 = vmatpush1.bf16.msra.mxu0 %v545
    %570 = vmatprep.subr.bf16.mxu0 0
    %571 = vmatpush1.bf16.msra.mxu0 0
    %572 = vmatprep.subr.bf16.mxu0 0
    %573 = vmatpush1.bf16.msra.mxu0 0
    %574 = vmatprep.subr.bf16.mxu0 0
    %575 = vmatpush1.bf16.msra.mxu0 0
    %576 = vmatprep.subr.bf16.mxu0 0
    %577 = vmatpush1.bf16.msra.mxu0 0
    %578 = vmatprep.subr.bf16.mxu0 0
    %579 = vmatpush1.bf16.msra.mxu0 0
    %580 = vmatprep.subr.bf16.mxu0 0
    %581 = vmatpush1.bf16.msra.mxu0 0
    %582 = vmatprep.subr.bf16.mxu0 0
    %583 = vmatpush1.bf16.msra.mxu0 0
    %584 = vmatprep.subr.bf16.mxu0 0
    %585 = vmatpush1.bf16.msra.mxu0 0
    %586 = vmatprep.mubr.bf16.mxu0 0
    %587 = vmatmul.mubr.bf16.gmra.mrb[0].mxu0 %v483
    %v588 = vpop.f32.mrb[0].mxu0
    %v589 = vadd.f32 %v505, %v588
    %v590 = vpop.f32.mrb[0].mxu0
    %v591 = vpop.f32.mrb[0].mxu0
    %v592 = vpop.f32.mrb[0].mxu0
    %593 = vdwg.mxu0
    %v594 = vmul.f32 %v589, %v589
    %595 = vadd.xlane.f32.xlu0 %v594
    %v596 = vpop.xlane.xlu0 %595
    %v597 = vrsqrt.pop %v596
    %v598 = vmul.f32 %v589, %v597
    %v599 = vpack.c.bf16 %v598, %v598
    %s600 = scalar_lea.vmem [#allocation7], 256
    %v601 = vld [vmem:[%s600] sm:$0xf]
    %v602 = vld [vmem:[%s600 + $0x4] sm:$0xf]
    %v603 = vld [vmem:[%s600 + $0x8] sm:$0xf]
    %v604 = vld [vmem:[%s600 + $0xc] sm:$0xf]
    %v605 = vld [vmem:[%s600 + $0x10] sm:$0xf]
    %v606 = vld [vmem:[%s600 + $0x14] sm:$0xf]
    %v607 = vld [vmem:[%s600 + $0x18] sm:$0xf]
    %v608 = vld [vmem:[%s600 + $0x1c] sm:$0xf]
    %v609 = vld [vmem:[%s600 + $0x20] sm:$0xf]
    %v610 = vld [vmem:[%s600 + $0x24] sm:$0xf]
    %v611 = vld [vmem:[%s600 + $0x28] sm:$0xf]
    %v612 = vld [vmem:[%s600 + $0x2c] sm:$0xf]
    %v613 = vld [vmem:[%s600 + $0x30] sm:$0xf]
    %v614 = vld [vmem:[%s600 + $0x34] sm:$0xf]
    %v615 = vld [vmem:[%s600 + $0x38] sm:$0xf]
    %v616 = vld [vmem:[%s600 + $0x3c] sm:$0xf]
    %v617 = vld [vmem:[#allocation8 + $0x5] sm:$0x1]
    %v618 = vlaneseq
    %v619 = vshrl.u32 %v618, 7
    %v620 = vsub.s32 0, %v619
    %v621 = vrot.slane %v617, %v620
    %v638 = vunpack.c.l.b16 %v601
    %v639 = vunpack.c.l.b16 %v602
    %v640 = vunpack.c.l.b16 %v603
    %v641 = vunpack.c.l.b16 %v604
    %v642 = vunpack.c.l.b16 %v605
    %v643 = vunpack.c.l.b16 %v606
    %v644 = vunpack.c.l.b16 %v607
    %v645 = vunpack.c.l.b16 %v608
    %v646 = vunpack.c.l.b16 %v609
    %v647 = vunpack.c.l.b16 %v610
    %v648 = vunpack.c.l.b16 %v611
    %v649 = vunpack.c.l.b16 %v612
    %v650 = vunpack.c.l.b16 %v613
    %v651 = vunpack.c.l.b16 %v614
    %v652 = vunpack.c.l.b16 %v615
    %v653 = vunpack.c.l.b16 %v616
    %v654 = vpack.c.b16 %v639, %v638
    %v655 = vpack.c.b16 %v641, %v640
    %v656 = vpack.c.b16 %v643, %v642
    %v657 = vpack.c.b16 %v645, %v644
    %v658 = vpack.c.b16 %v647, %v646
    %v659 = vpack.c.b16 %v649, %v648
    %v660 = vpack.c.b16 %v651, %v650
    %v661 = vpack.c.b16 %v653, %v652
    %670 = vmatprep.subr.bf16.mxu0 0
    %671 = vmatpush1.bf16.msra.mxu0 %v654
    %672 = vmatprep.subr.bf16.mxu0 0
    %673 = vmatpush1.bf16.msra.mxu0 %v655
    %674 = vmatprep.subr.bf16.mxu0 0
    %675 = vmatpush1.bf16.msra.mxu0 %v656
    %676 = vmatprep.subr.bf16.mxu0 0
    %677 = vmatpush1.bf16.msra.mxu0 %v657
    %678 = vmatprep.subr.bf16.mxu0 0
    %679 = vmatpush1.bf16.msra.mxu0 %v658
    %680 = vmatprep.subr.bf16.mxu0 0
    %681 = vmatpush1.bf16.msra.mxu0 %v659
    %682 = vmatprep.subr.bf16.mxu0 0
    %683 = vmatpush1.bf16.msra.mxu0 %v660
    %684 = vmatprep.subr.bf16.mxu0 0
    %685 = vmatpush1.bf16.msra.mxu0 %v661
    %686 = vmatprep.subr.bf16.mxu0 0
    %687 = vmatpush1.bf16.msra.mxu0 0
    %688 = vmatprep.subr.bf16.mxu0 0
    %689 = vmatpush1.bf16.msra.mxu0 0
    %690 = vmatprep.subr.bf16.mxu0 0
    %691 = vmatpush1.bf16.msra.mxu0 0
    %692 = vmatprep.subr.bf16.mxu0 0
    %693 = vmatpush1.bf16.msra.mxu0 0
    %694 = vmatprep.subr.bf16.mxu0 0
    %695 = vmatpush1.bf16.msra.mxu0 0
    %696 = vmatprep.subr.bf16.mxu0 0
    %697 = vmatpush1.bf16.msra.mxu0 0
    %698 = vmatprep.subr.bf16.mxu0 0
    %699 = vmatpush1.bf16.msra.mxu0 0
    %700 = vmatprep.subr.bf16.mxu0 0
    %701 = vmatpush1.bf16.msra.mxu0 0
    %702 = vmatprep.mubr.bf16.mxu0 0
    %703 = vmatmul.mubr.bf16.gmra.mrb[0].mxu0 %v599
    %v704 = vpop.f32.mrb[0].mxu0
    %v705 = vadd.f32 %v621, %v704
    %v706 = vpop.f32.mrb[0].mxu0
    %v707 = vpop.f32.mrb[0].mxu0
    %v708 = vpop.f32.mrb[0].mxu0
    %709 = vdwg.mxu0
    %v710 = vmax.f32 %v705, 0.0
    %v711 = vpack.c.bf16 %v710, %v710
    %s712 = scalar_lea.vmem [#allocation7], 320
    %v713 = vld [vmem:[%s712] sm:$0xf]
    %v714 = vld [vmem:[%s712 + $0x4] sm:$0xf]
    %v715 = vld [vmem:[%s712 + $0x8] sm:$0xf]
    %v716 = vld [vmem:[%s712 + $0xc] sm:$0xf]
    %v717 = vld [vmem:[%s712 + $0x10] sm:$0xf]
    %v718 = vld [vmem:[%s712 + $0x14] sm:$0xf]
    %v719 = vld [vmem:[%s712 + $0x18] sm:$0xf]
    %v720 = vld [vmem:[%s712 + $0x1c] sm:$0xf]
    %v721 = vld [vmem:[%s712 + $0x20] sm:$0xf]
    %v722 = vld [vmem:[%s712 + $0x24] sm:$0xf]
    %v723 = vld [vmem:[%s712 + $0x28] sm:$0xf]
    %v724 = vld [vmem:[%s712 + $0x2c] sm:$0xf]
    %v725 = vld [vmem:[%s712 + $0x30] sm:$0xf]
    %v726 = vld [vmem:[%s712 + $0x34] sm:$0xf]
    %v727 = vld [vmem:[%s712 + $0x38] sm:$0xf]
    %v728 = vld [vmem:[%s712 + $0x3c] sm:$0xf]
    %v729 = vld [vmem:[#allocation8 + $0x6] sm:$0x1]
    %v730 = vlaneseq
    %v731 = vshrl.u32 %v730, 7
    %v732 = vsub.s32 0, %v731
    %v733 = vrot.slane %v729, %v732
    %v750 = vunpack.c.l.b16 %v713
    %v751 = vunpack.c.l.b16 %v714
    %v752 = vunpack.c.l.b16 %v715
    %v753 = vunpack.c.l.b16 %v716
    %v754 = vunpack.c.l.b16 %v717
    %v755 = vunpack.c.l.b16 %v718
    %v756 = vunpack.c.l.b16 %v719
    %v757 = vunpack.c.l.b16 %v720
    %v758 = vunpack.c.l.b16 %v721
    %v759 = vunpack.c.l.b16 %v722
    %v760 = vunpack.c.l.b16 %v723
    %v761 = vunpack.c.l.b16 %v724
    %v762 = vunpack.c.l.b16 %v725
    %v763 = vunpack.c.l.b16 %v726
    %v764 = vunpack.c.l.b16 %v727
    %v765 = vunpack.c.l.b16 %v728
    %v766 = vpack.c.b16 %v751, %v750
    %v767 = vpack.c.b16 %v753, %v752
    %v768 = vpack.c.b16 %v755, %v754
    %v769 = vpack.c.b16 %v757, %v756
    %v770 = vpack.c.b16 %v759, %v758
    %v771 = vpack.c.b16 %v761, %v760
    %v772 = vpack.c.b16 %v763, %v762
    %v773 = vpack.c.b16 %v765, %v764
    %782 = vmatprep.subr.bf16.mxu0 0
    %783 = vmatpush1.bf16.msra.mxu0 %v766
    %784 = vmatprep.subr.bf16.mxu0 0
    %785 = vmatpush1.bf16.msra.mxu0 %v767
    %786 = vmatprep.subr.bf16.mxu0 0
    %787 = vmatpush1.bf16.msra.mxu0 %v768
    %788 = vmatprep.subr.bf16.mxu0 0
    %789 = vmatpush1.bf16.msra.mxu0 %v769
    %790 = vmatprep.subr.bf16.mxu0 0
    %791 = vmatpush1.bf16.msra.mxu0 %v770
    %792 = vmatprep.subr.bf16.mxu0 0
    %793 = vmatpush1.bf16.msra.mxu0 %v771
    %794 = vmatprep.subr.bf16.mxu0 0
    %795 = vmatpush1.bf16.msra.mxu0 %v772
    %796 = vmatprep.subr.bf16.mxu0 0
    %797 = vmatpush1.bf16.msra.mxu0 %v773
    %798 = vmatprep.subr.bf16.mxu0 0
    %799 = vmatpush1.bf16.msra.mxu0 0
    %800 = vmatprep.subr.bf16.mxu0 0
    %801 = vmatpush1.bf16.msra.mxu0 0
    %802 = vmatprep.subr.bf16.mxu0 0
    %803 = vmatpush1.bf16.msra.mxu0 0
    %804 = vmatprep.subr.bf16.mxu0 0
    %805 = vmatpush1.bf16.msra.mxu0 0
    %806 = vmatprep.subr.bf16.mxu0 0
    %807 = vmatpush1.bf16.msra.mxu0 0
    %808 = vmatprep.subr.bf16.mxu0 0
    %809 = vmatpush1.bf16.msra.mxu0 0
    %810 = vmatprep.subr.bf16.mxu0 0
    %811 = vmatpush1.bf16.msra.mxu0 0
    %812 = vmatprep.subr.bf16.mxu0 0
    %813 = vmatpush1.bf16.msra.mxu0 0
    %814 = vmatprep.mubr.bf16.mxu0 0
    %815 = vmatmul.mubr.bf16.gmra.mrb[0].mxu0 %v711
    %v816 = vpop.f32.mrb[0].mxu0
    %v817 = vadd.f32 %v733, %v816
    %v818 = vpop.f32.mrb[0].mxu0
    %v819 = vpop.f32.mrb[0].mxu0
    %v820 = vpop.f32.mrb[0].mxu0
    %821 = vdwg.mxu0
    %v822 = vmax.f32 %v817, 0.0
    %v823 = vpack.c.bf16 %v822, %v822
    %s824 = scalar_lea.vmem [#allocation7], 384
    %v825 = vld [vmem:[%s824] sm:$0xf]
    %v826 = vld [vmem:[%s824 + $0x4] sm:$0xf]
    %v827 = vld [vmem:[%s824 + $0x8] sm:$0xf]
    %v828 = vld [vmem:[%s824 + $0xc] sm:$0xf]
    %v829 = vld [vmem:[%s824 + $0x10] sm:$0xf]
    %v830 = vld [vmem:[%s824 + $0x14] sm:$0xf]
    %v831 = vld [vmem:[%s824 + $0x18] sm:$0xf]
    %v832 = vld [vmem:[%s824 + $0x1c] sm:$0xf]
    %v833 = vld [vmem:[%s824 + $0x20] sm:$0xf]
    %v834 = vld [vmem:[%s824 + $0x24] sm:$0xf]
    %v835 = vld [vmem:[%s824 + $0x28] sm:$0xf]
    %v836 = vld [vmem:[%s824 + $0x2c] sm:$0xf]
    %v837 = vld [vmem:[%s824 + $0x30] sm:$0xf]
    %v838 = vld [vmem:[%s824 + $0x34] sm:$0xf]
    %v839 = vld [vmem:[%s824 + $0x38] sm:$0xf]
    %v840 = vld [vmem:[%s824 + $0x3c] sm:$0xf]
    %v841 = vld [vmem:[#allocation8 + $0x7] sm:$0x1]
    %v842 = vlaneseq
    %v843 = vshrl.u32 %v842, 7
    %v844 = vsub.s32 0, %v843
    %v845 = vrot.slane %v841, %v844
    %v862 = vunpack.c.l.b16 %v825
    %v863 = vunpack.c.l.b16 %v826
    %v864 = vunpack.c.l.b16 %v827
    %v865 = vunpack.c.l.b16 %v828
    %v866 = vunpack.c.l.b16 %v829
    %v867 = vunpack.c.l.b16 %v830
    %v868 = vunpack.c.l.b16 %v831
    %v869 = vunpack.c.l.b16 %v832
    %v870 = vunpack.c.l.b16 %v833
    %v871 = vunpack.c.l.b16 %v834
    %v872 = vunpack.c.l.b16 %v835
    %v873 = vunpack.c.l.b16 %v836
    %v874 = vunpack.c.l.b16 %v837
    %v875 = vunpack.c.l.b16 %v838
    %v876 = vunpack.c.l.b16 %v839
    %v877 = vunpack.c.l.b16 %v840
    %v878 = vpack.c.b16 %v863, %v862
    %v879 = vpack.c.b16 %v865, %v864
    %v880 = vpack.c.b16 %v867, %v866
    %v881 = vpack.c.b16 %v869, %v868
    %v882 = vpack.c.b16 %v871, %v870
    %v883 = vpack.c.b16 %v873, %v872
    %v884 = vpack.c.b16 %v875, %v874
    %v885 = vpack.c.b16 %v877, %v876
    %894 = vmatprep.subr.bf16.mxu0 0
    %895 = vmatpush1.bf16.msra.mxu0 %v878
    %896 = vmatprep.subr.bf16.mxu0 0
    %897 = vmatpush1.bf16.msra.mxu0 %v879
    %898 = vmatprep.subr.bf16.mxu0 0
    %899 = vmatpush1.bf16.msra.mxu0 %v880
    %900 = vmatprep.subr.bf16.mxu0 0
    %901 = vmatpush1.bf16.msra.mxu0 %v881
    %902 = vmatprep.subr.bf16.mxu0 0
    %903 = vmatpush1.bf16.msra.mxu0 %v882
    %904 = vmatprep.subr.bf16.mxu0 0
    %905 = vmatpush1.bf16.msra.mxu0 %v883
    %906 = vmatprep.subr.bf16.mxu0 0
    %907 = vmatpush1.bf16.msra.mxu0 %v884
    %908 = vmatprep.subr.bf16.mxu0 0
    %909 = vmatpush1.bf16.msra.mxu0 %v885
    %910 = vmatprep.subr.bf16.mxu0 0
    %911 = vmatpush1.bf16.msra.mxu0 0
    %912 = vmatprep.subr.bf16.mxu0 0
    %913 = vmatpush1.bf16.msra.mxu0 0
    %914 = vmatprep.subr.bf16.mxu0 0
    %915 = vmatpush1.bf16.msra.mxu0 0
    %916 = vmatprep.subr.bf16.mxu0 0
    %917 = vmatpush1.bf16.msra.mxu0 0
    %918 = vmatprep.subr.bf16.mxu0 0
    %919 = vmatpush1.bf16.msra.mxu0 0
    %920 = vmatprep.subr.bf16.mxu0 0
    %921 = vmatpush1.bf16.msra.mxu0 0
    %922 = vmatprep.subr.bf16.mxu0 0
    %923 = vmatpush1.bf16.msra.mxu0 0
    %924 = vmatprep.subr.bf16.mxu0 0
    %925 = vmatpush1.bf16.msra.mxu0 0
    %926 = vmatprep.mubr.bf16.mxu0 0
    %927 = vmatmul.mubr.bf16.gmra.mrb[0].mxu0 %v823
    %v928 = vpop.f32.mrb[0].mxu0
    %v929 = vadd.f32 %v845, %v928
    %v930 = vpop.f32.mrb[0].mxu0
    %v931 = vpop.f32.mrb[0].mxu0
    %v932 = vpop.f32.mrb[0].mxu0
    %933 = vdwg.mxu0
    %v934 = vmax.f32 %v929, 0.0
    %v935 = vpack.c.bf16 %v934, %v934
    %s936 = scalar_lea.vmem [#allocation7], 448
    %v937 = vld [vmem:[%s936] sm:$0xf]
    %v938 = vld [vmem:[%s936 + $0x4] sm:$0xf]
    %v939 = vld [vmem:[%s936 + $0x8] sm:$0xf]
    %v940 = vld [vmem:[%s936 + $0xc] sm:$0xf]
    %v941 = vld [vmem:[%s936 + $0x10] sm:$0xf]
    %v942 = vld [vmem:[%s936 + $0x14] sm:$0xf]
    %v943 = vld [vmem:[%s936 + $0x18] sm:$0xf]
    %v944 = vld [vmem:[%s936 + $0x1c] sm:$0xf]
    %v945 = vld [vmem:[%s936 + $0x20] sm:$0xf]
    %v946 = vld [vmem:[%s936 + $0x24] sm:$0xf]
    %v947 = vld [vmem:[%s936 + $0x28] sm:$0xf]
    %v948 = vld [vmem:[%s936 + $0x2c] sm:$0xf]
    %v949 = vld [vmem:[%s936 + $0x30] sm:$0xf]
    %v950 = vld [vmem:[%s936 + $0x34] sm:$0xf]
    %v951 = vld [vmem:[%s936 + $0x38] sm:$0xf]
    %v952 = vld [vmem:[%s936 + $0x3c] sm:$0xf]
    %v953 = vld [vmem:[#allocation8 + $0x8] sm:$0x1]
    %v954 = vlaneseq
    %v955 = vshrl.u32 %v954, 7
    %v956 = vsub.s32 0, %v955
    %v957 = vrot.slane %v953, %v956
    %v974 = vunpack.c.l.b16 %v937
    %v975 = vunpack.c.l.b16 %v938
    %v976 = vunpack.c.l.b16 %v939
    %v977 = vunpack.c.l.b16 %v940
    %v978 = vunpack.c.l.b16 %v941
    %v979 = vunpack.c.l.b16 %v942
    %v980 = vunpack.c.l.b16 %v943
    %v981 = vunpack.c.l.b16 %v944
    %v982 = vunpack.c.l.b16 %v945
    %v983 = vunpack.c.l.b16 %v946
    %v984 = vunpack.c.l.b16 %v947
    %v985 = vunpack.c.l.b16 %v948
    %v986 = vunpack.c.l.b16 %v949
    %v987 = vunpack.c.l.b16 %v950
    %v988 = vunpack.c.l.b16 %v951
    %v989 = vunpack.c.l.b16 %v952
    %v990 = vpack.c.b16 %v975, %v974
    %v991 = vpack.c.b16 %v977, %v976
    %v992 = vpack.c.b16 %v979, %v978
    %v993 = vpack.c.b16 %v981, %v980
    %v994 = vpack.c.b16 %v983, %v982
    %v995 = vpack.c.b16 %v985, %v984
    %v996 = vpack.c.b16 %v987, %v986
    %v997 = vpack.c.b16 %v989, %v988
    %1006 = vmatprep.subr.bf16.mxu0 0
    %1007 = vmatpush1.bf16.msra.mxu0 %v990
    %1008 = vmatprep.subr.bf16.mxu0 0
    %1009 = vmatpush1.bf16.msra.mxu0 %v991
    %1010 = vmatprep.subr.bf16.mxu0 0
    %1011 = vmatpush1.bf16.msra.mxu0 %v992
    %1012 = vmatprep.subr.bf16.mxu0 0
    %1013 = vmatpush1.bf16.msra.mxu0 %v993
    %1014 = vmatprep.subr.bf16.mxu0 0
    %1015 = vmatpush1.bf16.msra.mxu0 %v994
    %1016 = vmatprep.subr.bf16.mxu0 0
    %1017 = vmatpush1.bf16.msra.mxu0 %v995
    %1018 = vmatprep.subr.bf16.mxu0 0
    %1019 = vmatpush1.bf16.msra.mxu0 %v996
    %1020 = vmatprep.subr.bf16.mxu0 0
    %1021 = vmatpush1.bf16.msra.mxu0 %v997
    %1022 = vmatprep.subr.bf16.mxu0 0
    %1023 = vmatpush1.bf16.msra.mxu0 0
    %1024 = vmatprep.subr.bf16.mxu0 0
    %1025 = vmatpush1.bf16.msra.mxu0 0
    %1026 = vmatprep.subr.bf16.mxu0 0
    %1027 = vmatpush1.bf16.msra.mxu0 0
    %1028 = vmatprep.subr.bf16.mxu0 0
    %1029 = vmatpush1.bf16.msra.mxu0 0
    %1030 = vmatprep.subr.bf16.mxu0 0
    %1031 = vmatpush1.bf16.msra.mxu0 0
    %1032 = vmatprep.subr.bf16.mxu0 0
    %1033 = vmatpush1.bf16.msra.mxu0 0
    %1034 = vmatprep.subr.bf16.mxu0 0
    %1035 = vmatpush1.bf16.msra.mxu0 0
    %1036 = vmatprep.subr.bf16.mxu0 0
    %1037 = vmatpush1.bf16.msra.mxu0 0
    %1038 = vmatprep.mubr.bf16.mxu0 0
    %1039 = vmatmul.mubr.bf16.gmra.mrb[0].mxu0 %v935
    %v1040 = vpop.f32.mrb[0].mxu0
    %v1041 = vadd.f32 %v957, %v1040
    %v1042 = vpop.f32.mrb[0].mxu0
    %v1043 = vpop.f32.mrb[0].mxu0
    %v1044 = vpop.f32.mrb[0].mxu0
    %1045 = vdwg.mxu0
    %v1046 = vmax.f32 %v1041, 0.0
    %v1047 = vpack.c.bf16 %v1046, %v1046
    %s1048 = scalar_lea.vmem [#allocation7], 512
    %v1049 = vld [vmem:[%s1048] sm:$0xf]
    %v1050 = vld [vmem:[%s1048 + $0x4] sm:$0xf]
    %v1051 = vld [vmem:[%s1048 + $0x8] sm:$0xf]
    %v1052 = vld [vmem:[%s1048 + $0xc] sm:$0xf]
    %v1053 = vld [vmem:[%s1048 + $0x10] sm:$0xf]
    %v1054 = vld [vmem:[%s1048 + $0x14] sm:$0xf]
    %v1055 = vld [vmem:[%s1048 + $0x18] sm:$0xf]
    %v1056 = vld [vmem:[%s1048 + $0x1c] sm:$0xf]
    %v1057 = vld [vmem:[%s1048 + $0x20] sm:$0xf]
    %v1058 = vld [vmem:[%s1048 + $0x24] sm:$0xf]
    %v1059 = vld [vmem:[%s1048 + $0x28] sm:$0xf]
    %v1060 = vld [vmem:[%s1048 + $0x2c] sm:$0xf]
    %v1061 = vld [vmem:[%s1048 + $0x30] sm:$0xf]
    %v1062 = vld [vmem:[%s1048 + $0x34] sm:$0xf]
    %v1063 = vld [vmem:[%s1048 + $0x38] sm:$0xf]
    %v1064 = vld [vmem:[%s1048 + $0x3c] sm:$0xf]
    %v1065 = vld [vmem:[#allocation8 + $0x9] sm:$0x1]
    %v1066 = vlaneseq
    %v1067 = vshrl.u32 %v1066, 7
    %v1068 = vsub.s32 0, %v1067
    %v1069 = vrot.slane %v1065, %v1068
    %v1086 = vunpack.c.l.b16 %v1049
    %v1087 = vunpack.c.l.b16 %v1050
    %v1088 = vunpack.c.l.b16 %v1051
    %v1089 = vunpack.c.l.b16 %v1052
    %v1090 = vunpack.c.l.b16 %v1053
    %v1091 = vunpack.c.l.b16 %v1054
    %v1092 = vunpack.c.l.b16 %v1055
    %v1093 = vunpack.c.l.b16 %v1056
    %v1094 = vunpack.c.l.b16 %v1057
    %v1095 = vunpack.c.l.b16 %v1058
    %v1096 = vunpack.c.l.b16 %v1059
    %v1097 = vunpack.c.l.b16 %v1060
    %v1098 = vunpack.c.l.b16 %v1061
    %v1099 = vunpack.c.l.b16 %v1062
    %v1100 = vunpack.c.l.b16 %v1063
    %v1101 = vunpack.c.l.b16 %v1064
    %v1102 = vpack.c.b16 %v1087, %v1086
    %v1103 = vpack.c.b16 %v1089, %v1088
    %v1104 = vpack.c.b16 %v1091, %v1090
    %v1105 = vpack.c.b16 %v1093, %v1092
    %v1106 = vpack.c.b16 %v1095, %v1094
    %v1107 = vpack.c.b16 %v1097, %v1096
    %v1108 = vpack.c.b16 %v1099, %v1098
    %v1109 = vpack.c.b16 %v1101, %v1100
    %1118 = vmatprep.subr.bf16.mxu0 0
    %1119 = vmatpush1.bf16.msra.mxu0 %v1102
    %1120 = vmatprep.subr.bf16.mxu0 0
    %1121 = vmatpush1.bf16.msra.mxu0 %v1103
    %1122 = vmatprep.subr.bf16.mxu0 0
    %1123 = vmatpush1.bf16.msra.mxu0 %v1104
    %1124 = vmatprep.subr.bf16.mxu0 0
    %1125 = vmatpush1.bf16.msra.mxu0 %v1105
    %1126 = vmatprep.subr.bf16.mxu0 0
    %1127 = vmatpush1.bf16.msra.mxu0 %v1106
    %1128 = vmatprep.subr.bf16.mxu0 0
    %1129 = vmatpush1.bf16.msra.mxu0 %v1107
    %1130 = vmatprep.subr.bf16.mxu0 0
    %1131 = vmatpush1.bf16.msra.mxu0 %v1108
    %1132 = vmatprep.subr.bf16.mxu0 0
    %1133 = vmatpush1.bf16.msra.mxu0 %v1109
    %1134 = vmatprep.subr.bf16.mxu0 0
    %1135 = vmatpush1.bf16.msra.mxu0 0
    %1136 = vmatprep.subr.bf16.mxu0 0
    %1137 = vmatpush1.bf16.msra.mxu0 0
    %1138 = vmatprep.subr.bf16.mxu0 0
    %1139 = vmatpush1.bf16.msra.mxu0 0
    %1140 = vmatprep.subr.bf16.mxu0 0
    %1141 = vmatpush1.bf16.msra.mxu0 0
    %1142 = vmatprep.subr.bf16.mxu0 0
    %1143 = vmatpush1.bf16.msra.mxu0 0
    %1144 = vmatprep.subr.bf16.mxu0 0
    %1145 = vmatpush1.bf16.msra.mxu0 0
    %1146 = vmatprep.subr.bf16.mxu0 0
    %1147 = vmatpush1.bf16.msra.mxu0 0
    %1148 = vmatprep.subr.bf16.mxu0 0
    %1149 = vmatpush1.bf16.msra.mxu0 0
    %1150 = vmatprep.mubr.bf16.mxu0 0
    %1151 = vmatmul.mubr.bf16.gmra.mrb[0].mxu0 %v1047
    %v1152 = vpop.f32.mrb[0].mxu0
    %v1153 = vadd.f32 %v1069, %v1152
    %v1154 = vpop.f32.mrb[0].mxu0
    %v1155 = vpop.f32.mrb[0].mxu0
    %v1156 = vpop.f32.mrb[0].mxu0
    %1157 = vdwg.mxu0
    %vm1158 = vcmask 80896
    %1159 = vst.msk [vmem:[#allocation10] sm:$0xff] %vm1158, %v1153
    // Predicated region
    $region34: #{tpu_custom_call.1} parent=1 // pred_check
      _
    $region35: #{tpu_custom_call.1} parent=1 // pred_check_branch
      %1161 = sbr.rel (0) target = $region37
    $region36: #{tpu_custom_call.1} parent=1 // pred_region
      %s1163 = ssub.s32 128, 128
      %1164 = vsyncadd [#allocation4], %s1163
      %s1166 = sshll.u32 [#allocation10], 4
      %s1167 = int_to_ptr.vmem [resolvable:$true] %s1166
      %1169 = dma.vmem_to_hbm [thread:$0]  %s1167, 128, %s4, [#allocation4]
    $region37: #{tpu_custom_call.1} parent=1 // pred_fallthru
      _
    // Predicated region
    $region38: #{tpu_custom_call.1} parent=1 // pred_check
      _
    $region39: #{tpu_custom_call.1} parent=1 // pred_check_branch
      %1171 = sbr.rel (0) target = $region41
    $region40: #{tpu_custom_call.1} parent=1 // pred_region
      %1172 = dma.done [#allocation4], 128
    $region41: #{tpu_custom_call.1} parent=1 // pred_fallthru
      _
    %1173 = vsyncpa [#allocation3], 1
    %1174 = vsyncpa [#allocation6], 1
    %1175 = vsyncpa [#allocation9], 1
    %1176 = vsyncpa [#allocation4], 1

</llo_original>
